<compile_context>
chip_gen: v5e
topology: v5e:2x2
jax: 0.10.0
libtpu: 0.0.40
codegen_flags: <defaults>
</compile_context>

<pallas_src>
import math
from functools import partial

import jax
import jax.numpy as jnp
from jax.experimental import pallas as pl
from jax.experimental.pallas import tpu as pltpu

# ---- "settings" (synthetic, small) ----
SENT_DIM = 32
HIDDEN_DIM = 32
NUM_HEADS = 2
ALIGN_DIM = HIDDEN_DIM // NUM_HEADS  # 16
NS = 8    # number of sentences
NK = 16   # number of knowledge rows


def _attention_kernel(sent_ref, know_ref, mask_ref,
                      sw_ref, sb_ref, kw_ref, kb_ref,
                      cwt_ref, cb_ref,
                      weights_ref, out_ref, *, num_heads, align_dim):
    sent = sent_ref[...]          # (Ns, sent_dim)
    know = know_ref[...]          # (Nk, sent_dim)
    mask = mask_ref[...]          # (Ns, Nk)

    # Fused per-head projections: one matmul each for all heads.
    # 1/sqrt(align_dim) is already folded into sw/sb by the wrapper.
    S_all = jnp.dot(sent, sw_ref[...], preferred_element_type=jnp.float32) + sb_ref[...]
    K_all = jnp.dot(know, kw_ref[...], preferred_element_type=jnp.float32) + kb_ref[...]

    attn_list = []
    head_outs = []
    for h in range(num_heads):                      # static unroll (H is tiny)
        lo, hi = h * align_dim, (h + 1) * align_dim
        S_h = S_all[:, lo:hi]                       # (Ns, A)
        K_h = K_all[:, lo:hi]                       # (Nk, A)

        # scaled alignment scores, multiplicative mask (matches torch: * mask)
        scores = jnp.dot(S_h, K_h.T, preferred_element_type=jnp.float32)
        scores = scores * mask

        # softmax over dim=1 (reciprocal instead of a vector divide)
        m = jnp.max(scores, axis=1, keepdims=True)
        e = jnp.exp(scores - m)
        denom = jnp.sum(e, axis=1, keepdims=True)
        attn_w = e * pl.reciprocal(denom, approx=False)    # (Ns, Nk)

        attn_list.append(attn_w)
        head_outs.append(jnp.dot(attn_w, know,
                                 preferred_element_type=jnp.float32))  # (Ns, D)

    # weights: torch.cat(attention_weights_list, dim=0) -> (H*Ns, Nk)
    weights_ref[...] = jnp.concatenate(attn_list, axis=0)

    # combine_heads Linear: cat(outs, dim=1) @ Wc.T + bc, single matmul.
    head_cat = jnp.concatenate(head_outs, axis=1)          # (Ns, H*D)
    out_ref[...] = (jnp.dot(head_cat, cwt_ref[...],
                            preferred_element_type=jnp.float32) + cb_ref[...])


def attention_forward(sentences, knowledge, mask, params):
    """Returns (output [Ns, sent_dim], weights [H*Ns, Nk]) like the eval path."""
    sw, sb, kw, kb, cw, cb = (params["sw"], params["sb"], params["kw"],
                              params["kb"], params["cw"], params["cb"])
    H = sw.shape[0]
    Ns, D = sentences.shape
    Nk = knowledge.shape[0]
    A = sw.shape[-1]
    HA = H * A
    HD = H * D

    inv_scale = 1.0 / math.sqrt(A)

    # Fuse per-head projections into single wide operands:
    #   sw_all[:, h*A:(h+1)*A] == sw[h]  (same for kw_all), biases concatenated.
    # Fold the softmax scale into the S projection (one side is enough).
    sw_all = (jnp.transpose(sw, (1, 0, 2)).reshape(D, HA) * inv_scale)
    sb_all = (sb.reshape(1, HA) * inv_scale)
    kw_all = jnp.transpose(kw, (1, 0, 2)).reshape(D, HA)
    kb_all = kb.reshape(1, HA)
    cwt = cw.T                      # (H*sent_dim, sent_dim)
    cb2 = cb.reshape(1, D)

    grid_spec = pltpu.PrefetchScalarGridSpec(
        num_scalar_prefetch=0,
        grid=(1,),                                         # single invocation
        in_specs=[
            pl.BlockSpec((Ns, D), lambda i: (0, 0)),       # sentences
            pl.BlockSpec((Nk, D), lambda i: (0, 0)),       # knowledge
            pl.BlockSpec((Ns, Nk), lambda i: (0, 0)),      # mask
            pl.BlockSpec((D, HA), lambda i: (0, 0)),       # fused s_proj weights (pre-scaled)
            pl.BlockSpec((1, HA), lambda i: (0, 0)),       # fused s_proj bias (pre-scaled)
            pl.BlockSpec((D, HA), lambda i: (0, 0)),       # fused k_proj weights
            pl.BlockSpec((1, HA), lambda i: (0, 0)),       # fused k_proj bias
            pl.BlockSpec((HD, D), lambda i: (0, 0)),       # combine weight (transposed)
            pl.BlockSpec((1, D), lambda i: (0, 0)),        # combine bias
        ],
        out_specs=[
            pl.BlockSpec((H * Ns, Nk), lambda i: (0, 0)),  # weights (cat over heads, dim 0)
            pl.BlockSpec((Ns, D), lambda i: (0, 0)),       # output
        ],
    )

    weights, output = pl.pallas_call(
        partial(_attention_kernel, num_heads=H, align_dim=A),
        grid_spec=grid_spec,
        out_shape=(
            jax.ShapeDtypeStruct((H * Ns, Nk), jnp.float32),
            jax.ShapeDtypeStruct((Ns, D), jnp.float32),
        ),
        compiler_params=pltpu.CompilerParams(
            dimension_semantics=("arbitrary",)),
    )(sentences, knowledge, mask, sw_all, sb_all, kw_all, kb_all, cwt, cb2)

    return output, weights


def reference_forward(sentences, knowledge, mask, params):
    sw, sb, kw, kb, cw, cb = (params["sw"], params["sb"], params["kw"],
                              params["kb"], params["cw"], params["cb"])
    H = sw.shape[0]
    ws, outs = [], []
    for h in range(H):
        S = sentences @ sw[h] + sb[h]
        K = knowledge @ kw[h] + kb[h]
        a = (S @ K.T) / math.sqrt(sw.shape[-1])
        a = a * mask
        w = jax.nn.softmax(a, axis=1)
        o = w @ knowledge
        ws.append(w)
        outs.append(o)
    weights = jnp.concatenate(ws, axis=0)
    output = jnp.concatenate(outs, axis=1) @ cw.T + cb
    return output, weights


def init_params(key):
    ks = jax.random.split(key, 6)
    bnd_p = 1.0 / math.sqrt(SENT_DIM)              # fan_in of the per-head projections
    bnd_c = 1.0 / math.sqrt(NUM_HEADS * SENT_DIM)  # fan_in of combine_heads
    return {
        "sw": jax.random.uniform(ks[0], (NUM_HEADS, SENT_DIM, ALIGN_DIM), jnp.float32, -bnd_p, bnd_p),
        "sb": jax.random.uniform(ks[1], (NUM_HEADS, ALIGN_DIM), jnp.float32, -bnd_p, bnd_p),
        "kw": jax.random.uniform(ks[2], (NUM_HEADS, SENT_DIM, ALIGN_DIM), jnp.float32, -bnd_p, bnd_p),
        "kb": jax.random.uniform(ks[3], (NUM_HEADS, ALIGN_DIM), jnp.float32, -bnd_p, bnd_p),
        "cw": jax.random.uniform(ks[4], (SENT_DIM, NUM_HEADS * SENT_DIM), jnp.float32, -bnd_c, bnd_c),
        "cb": jax.random.uniform(ks[5], (SENT_DIM,), jnp.float32, -bnd_c, bnd_c),
    }


if __name__ == "__main__":
    key = jax.random.PRNGKey(0)
    kp, k1, k2, k3 = jax.random.split(key, 4)

    params = init_params(kp)
    sentences = jax.random.normal(k1, (NS, SENT_DIM), jnp.float32)
    knowledge = jax.random.normal(k2, (NK, SENT_DIM), jnp.float32)
    # binary mask like knowledge.mask (multiplicative, matching the torch code)
    mask = (jax.random.uniform(k3, (NS, NK)) > 0.2).astype(jnp.float32)

    output, weights = attention_forward(sentences, knowledge, mask, params)
    output = jax.block_until_ready(output)
    weights = jax.block_until_ready(weights)

    ref_out, ref_w = reference_forward(sentences, knowledge, mask, params)
    assert jnp.allclose(output, ref_out, atol=1e-5, rtol=1e-5)
    assert jnp.allclose(weights, ref_w, atol=1e-5, rtol=1e-5)

    print("KERNEL_OK")
</pallas_src>

<mosaic_0001>
module attributes {stable_mosaic.version = 11 : i64} {
  func.func @_attention_kernel(%arg0: i32, %arg1: memref<8x32xf32, #tpu.memory_space<vmem>>, %arg2: memref<16x32xf32, #tpu.memory_space<vmem>>, %arg3: memref<8x16xf32, #tpu.memory_space<vmem>>, %arg4: memref<32x32xf32, #tpu.memory_space<vmem>>, %arg5: memref<1x32xf32, #tpu.memory_space<vmem>>, %arg6: memref<32x32xf32, #tpu.memory_space<vmem>>, %arg7: memref<1x32xf32, #tpu.memory_space<vmem>>, %arg8: memref<64x32xf32, #tpu.memory_space<vmem>>, %arg9: memref<1x32xf32, #tpu.memory_space<vmem>>, %arg10: memref<16x16xf32, #tpu.memory_space<vmem>>, %arg11: memref<8x32xf32, #tpu.memory_space<vmem>>) attributes {dimension_semantics = [#tpu.dimension_semantics<arbitrary>], iteration_bounds = array<i64: 1>, scalar_prefetch = 0 : i64, scratch_operands = 0 : i64, tpu.core_type = #tpu.core_type<tc>, window_params = [{pipeline_mode = #tpu.pipeline_mode<synchronous>, transform_indices = @transform_0, window_bounds = array<i64: 8, 32>}, {pipeline_mode = #tpu.pipeline_mode<synchronous>, transform_indices = @transform_1, window_bounds = array<i64: 16, 32>}, {pipeline_mode = #tpu.pipeline_mode<synchronous>, transform_indices = @transform_2, window_bounds = array<i64: 8, 16>}, {pipeline_mode = #tpu.pipeline_mode<synchronous>, transform_indices = @transform_3, window_bounds = array<i64: 32, 32>}, {pipeline_mode = #tpu.pipeline_mode<synchronous>, transform_indices = @transform_4, window_bounds = array<i64: 1, 32>}, {pipeline_mode = #tpu.pipeline_mode<synchronous>, transform_indices = @transform_5, window_bounds = array<i64: 32, 32>}, {pipeline_mode = #tpu.pipeline_mode<synchronous>, transform_indices = @transform_6, window_bounds = array<i64: 1, 32>}, {pipeline_mode = #tpu.pipeline_mode<synchronous>, transform_indices = @transform_7, window_bounds = array<i64: 64, 32>}, {pipeline_mode = #tpu.pipeline_mode<synchronous>, transform_indices = @transform_8, window_bounds = array<i64: 1, 32>}, {pipeline_mode = #tpu.pipeline_mode<synchronous>, transform_indices = @transform_9, window_bounds = array<i64: 16, 16>}, {pipeline_mode = #tpu.pipeline_mode<synchronous>, transform_indices = @transform_10, window_bounds = array<i64: 8, 32>}]} {
    %c0 = arith.constant 0 : index
    %c0_0 = arith.constant 0 : index
    %0 = vector.load %arg1[%c0, %c0_0] : memref<8x32xf32, #tpu.memory_space<vmem>>, vector<8x32xf32>
    %c0_1 = arith.constant 0 : index
    %c0_2 = arith.constant 0 : index
    %1 = vector.load %arg2[%c0_1, %c0_2] : memref<16x32xf32, #tpu.memory_space<vmem>>, vector<16x32xf32>
    %c0_3 = arith.constant 0 : index
    %c0_4 = arith.constant 0 : index
    %2 = vector.load %arg3[%c0_3, %c0_4] : memref<8x16xf32, #tpu.memory_space<vmem>>, vector<8x16xf32>
    %c0_5 = arith.constant 0 : index
    %c0_6 = arith.constant 0 : index
    %3 = vector.load %arg4[%c0_5, %c0_6] : memref<32x32xf32, #tpu.memory_space<vmem>>, vector<32x32xf32>
    %cst = arith.constant dense<0.000000e+00> : vector<8x32xf32>
    %4 = tpu.matmul %0, %3, %cst {dimension_numbers = #tpu.dot_dimension_numbers<[1], [0], [0], [1], [0, 0, 1, 1], [], []>} : vector<8x32xf32>, vector<32x32xf32>, vector<8x32xf32> -> vector<8x32xf32>
    %c0_7 = arith.constant 0 : index
    %c0_8 = arith.constant 0 : index
    %5 = vector.load %arg5[%c0_7, %c0_8] : memref<1x32xf32, #tpu.memory_space<vmem>>, vector<1x32xf32>
    %6 = vector.broadcast %5 : vector<1x32xf32> to vector<8x32xf32>
    %7 = arith.addf %4, %6 : vector<8x32xf32>
    %c0_9 = arith.constant 0 : index
    %c0_10 = arith.constant 0 : index
    %8 = vector.load %arg6[%c0_9, %c0_10] : memref<32x32xf32, #tpu.memory_space<vmem>>, vector<32x32xf32>
    %cst_11 = arith.constant dense<0.000000e+00> : vector<16x32xf32>
    %9 = tpu.matmul %1, %8, %cst_11 {dimension_numbers = #tpu.dot_dimension_numbers<[1], [0], [0], [1], [0, 0, 1, 1], [], []>} : vector<16x32xf32>, vector<32x32xf32>, vector<16x32xf32> -> vector<16x32xf32>
    %c0_12 = arith.constant 0 : index
    %c0_13 = arith.constant 0 : index
    %10 = vector.load %arg7[%c0_12, %c0_13] : memref<1x32xf32, #tpu.memory_space<vmem>>, vector<1x32xf32>
    %11 = vector.broadcast %10 : vector<1x32xf32> to vector<16x32xf32>
    %12 = arith.addf %9, %11 : vector<16x32xf32>
    %13 = vector.extract_strided_slice %7 {offsets = [0, 0], sizes = [8, 16], strides = [1, 1]} : vector<8x32xf32> to vector<8x16xf32>
    %14 = vector.extract_strided_slice %12 {offsets = [0, 0], sizes = [16, 16], strides = [1, 1]} : vector<16x32xf32> to vector<16x16xf32>
    %15 = tpu.transpose %14, [1, 0] : vector<16x16xf32> -> vector<16x16xf32>
    %cst_14 = arith.constant dense<0.000000e+00> : vector<8x16xf32>
    %16 = tpu.matmul %13, %15, %cst_14 {dimension_numbers = #tpu.dot_dimension_numbers<[1], [0], [0], [1], [0, 0, 1, 1], [], []>} : vector<8x16xf32>, vector<16x16xf32>, vector<8x16xf32> -> vector<8x16xf32>
    %17 = arith.mulf %16, %2 : vector<8x16xf32>
    %cst_15 = arith.constant dense<0xFF800000> : vector<8xf32>
    %18 = vector.multi_reduction <maximumf>, %17, %cst_15 [1] : vector<8x16xf32> to vector<8xf32>
    %19 = vector.shape_cast %18 : vector<8xf32> to vector<8x1xf32>
    %20 = vector.broadcast %19 : vector<8x1xf32> to vector<8x16xf32>
    %21 = arith.subf %17, %20 : vector<8x16xf32>
    %22 = math.exp %21 : vector<8x16xf32>
    %cst_16 = arith.constant dense<0.000000e+00> : vector<8xf32>
    %23 = vector.multi_reduction <add>, %22, %cst_16 [1] : vector<8x16xf32> to vector<8xf32>
    %24 = vector.shape_cast %23 : vector<8xf32> to vector<8x1xf32>
    %25 = tpu.reciprocal %24 : vector<8x1xf32> -> vector<8x1xf32>
    %26 = vector.broadcast %25 : vector<8x1xf32> to vector<8x16xf32>
    %27 = arith.mulf %22, %26 : vector<8x16xf32>
    %cst_17 = arith.constant dense<0.000000e+00> : vector<8x32xf32>
    %28 = tpu.matmul %27, %1, %cst_17 {dimension_numbers = #tpu.dot_dimension_numbers<[1], [0], [0], [1], [0, 0, 1, 1], [], []>} : vector<8x16xf32>, vector<16x32xf32>, vector<8x32xf32> -> vector<8x32xf32>
    %29 = vector.extract_strided_slice %7 {offsets = [0, 16], sizes = [8, 16], strides = [1, 1]} : vector<8x32xf32> to vector<8x16xf32>
    %30 = vector.extract_strided_slice %12 {offsets = [0, 16], sizes = [16, 16], strides = [1, 1]} : vector<16x32xf32> to vector<16x16xf32>
    %31 = tpu.transpose %30, [1, 0] : vector<16x16xf32> -> vector<16x16xf32>
    %cst_18 = arith.constant dense<0.000000e+00> : vector<8x16xf32>
    %32 = tpu.matmul %29, %31, %cst_18 {dimension_numbers = #tpu.dot_dimension_numbers<[1], [0], [0], [1], [0, 0, 1, 1], [], []>} : vector<8x16xf32>, vector<16x16xf32>, vector<8x16xf32> -> vector<8x16xf32>
    %33 = arith.mulf %32, %2 : vector<8x16xf32>
    %cst_19 = arith.constant dense<0xFF800000> : vector<8xf32>
    %34 = vector.multi_reduction <maximumf>, %33, %cst_19 [1] : vector<8x16xf32> to vector<8xf32>
    %35 = vector.shape_cast %34 : vector<8xf32> to vector<8x1xf32>
    %36 = vector.broadcast %35 : vector<8x1xf32> to vector<8x16xf32>
    %37 = arith.subf %33, %36 : vector<8x16xf32>
    %38 = math.exp %37 : vector<8x16xf32>
    %cst_20 = arith.constant dense<0.000000e+00> : vector<8xf32>
    %39 = vector.multi_reduction <add>, %38, %cst_20 [1] : vector<8x16xf32> to vector<8xf32>
    %40 = vector.shape_cast %39 : vector<8xf32> to vector<8x1xf32>
    %41 = tpu.reciprocal %40 : vector<8x1xf32> -> vector<8x1xf32>
    %42 = vector.broadcast %41 : vector<8x1xf32> to vector<8x16xf32>
    %43 = arith.mulf %38, %42 : vector<8x16xf32>
    %cst_21 = arith.constant dense<0.000000e+00> : vector<8x32xf32>
    %44 = tpu.matmul %43, %1, %cst_21 {dimension_numbers = #tpu.dot_dimension_numbers<[1], [0], [0], [1], [0, 0, 1, 1], [], []>} : vector<8x16xf32>, vector<16x32xf32>, vector<8x32xf32> -> vector<8x32xf32>
    %45 = tpu.concatenate %27, %43 in 0 : vector<8x16xf32>, vector<8x16xf32> -> vector<16x16xf32>
    %c0_22 = arith.constant 0 : index
    %c0_23 = arith.constant 0 : index
    %46 = vector.load %arg10[%c0_22, %c0_23] : memref<16x16xf32, #tpu.memory_space<vmem>>, vector<16x16xf32>
    tpu.vector_store %arg10[%c0_22, %c0_23], %45 {strides = array<i32>} : memref<16x16xf32, #tpu.memory_space<vmem>>, vector<16x16xf32>,
    %47 = tpu.concatenate %28, %44 in 1 : vector<8x32xf32>, vector<8x32xf32> -> vector<8x64xf32>
    %c0_24 = arith.constant 0 : index
    %c0_25 = arith.constant 0 : index
    %48 = vector.load %arg8[%c0_24, %c0_25] : memref<64x32xf32, #tpu.memory_space<vmem>>, vector<64x32xf32>
    %cst_26 = arith.constant dense<0.000000e+00> : vector<8x32xf32>
    %49 = tpu.matmul %47, %48, %cst_26 {dimension_numbers = #tpu.dot_dimension_numbers<[1], [0], [0], [1], [0, 0, 1, 1], [], []>} : vector<8x64xf32>, vector<64x32xf32>, vector<8x32xf32> -> vector<8x32xf32>
    %c0_27 = arith.constant 0 : index
    %c0_28 = arith.constant 0 : index
    %50 = vector.load %arg9[%c0_27, %c0_28] : memref<1x32xf32, #tpu.memory_space<vmem>>, vector<1x32xf32>
    %51 = vector.broadcast %50 : vector<1x32xf32> to vector<8x32xf32>
    %52 = arith.addf %49, %51 : vector<8x32xf32>
    %c0_29 = arith.constant 0 : index
    %c0_30 = arith.constant 0 : index
    %53 = vector.load %arg11[%c0_29, %c0_30] : memref<8x32xf32, #tpu.memory_space<vmem>>, vector<8x32xf32>
    tpu.vector_store %arg11[%c0_29, %c0_30], %52 {strides = array<i32>} : memref<8x32xf32, #tpu.memory_space<vmem>>, vector<8x32xf32>,
    return
  }
  func.func @transform_0(%arg0: i32) -> (i32, i32) {
    %c0_i32 = arith.constant 0 : i32
    %c0_i32_0 = arith.constant 0 : i32
    %c0_i32_1 = arith.constant 0 : i32
    return %c0_i32, %c0_i32_0 : i32, i32
  }
  func.func @transform_1(%arg0: i32) -> (i32, i32) {
    %c0_i32 = arith.constant 0 : i32
    %c0_i32_0 = arith.constant 0 : i32
    %c0_i32_1 = arith.constant 0 : i32
    return %c0_i32, %c0_i32_0 : i32, i32
  }
  func.func @transform_2(%arg0: i32) -> (i32, i32) {
    %c0_i32 = arith.constant 0 : i32
    %c0_i32_0 = arith.constant 0 : i32
    %c0_i32_1 = arith.constant 0 : i32
    return %c0_i32, %c0_i32_0 : i32, i32
  }
  func.func @transform_3(%arg0: i32) -> (i32, i32) {
    %c0_i32 = arith.constant 0 : i32
    %c0_i32_0 = arith.constant 0 : i32
    %c0_i32_1 = arith.constant 0 : i32
    return %c0_i32, %c0_i32_0 : i32, i32
  }
  func.func @transform_4(%arg0: i32) -> (i32, i32) {
    %c0_i32 = arith.constant 0 : i32
    %c0_i32_0 = arith.constant 0 : i32
    %c0_i32_1 = arith.constant 0 : i32
    return %c0_i32, %c0_i32_0 : i32, i32
  }
  func.func @transform_5(%arg0: i32) -> (i32, i32) {
    %c0_i32 = arith.constant 0 : i32
    %c0_i32_0 = arith.constant 0 : i32
    %c0_i32_1 = arith.constant 0 : i32
    return %c0_i32, %c0_i32_0 : i32, i32
  }
  func.func @transform_6(%arg0: i32) -> (i32, i32) {
    %c0_i32 = arith.constant 0 : i32
    %c0_i32_0 = arith.constant 0 : i32
    %c0_i32_1 = arith.constant 0 : i32
    return %c0_i32, %c0_i32_0 : i32, i32
  }
  func.func @transform_7(%arg0: i32) -> (i32, i32) {
    %c0_i32 = arith.constant 0 : i32
    %c0_i32_0 = arith.constant 0 : i32
    %c0_i32_1 = arith.constant 0 : i32
    return %c0_i32, %c0_i32_0 : i32, i32
  }
  func.func @transform_8(%arg0: i32) -> (i32, i32) {
    %c0_i32 = arith.constant 0 : i32
    %c0_i32_0 = arith.constant 0 : i32
    %c0_i32_1 = arith.constant 0 : i32
    return %c0_i32, %c0_i32_0 : i32, i32
  }
  func.func @transform_9(%arg0: i32) -> (i32, i32) {
    %c0_i32 = arith.constant 0 : i32
    %c0_i32_0 = arith.constant 0 : i32
    %c0_i32_1 = arith.constant 0 : i32
    return %c0_i32, %c0_i32_0 : i32, i32
  }
  func.func @transform_10(%arg0: i32) -> (i32, i32) {
    %c0_i32 = arith.constant 0 : i32
    %c0_i32_0 = arith.constant 0 : i32
    %c0_i32_1 = arith.constant 0 : i32
    return %c0_i32, %c0_i32_0 : i32, i32
  }
}

</mosaic_0001>

<llo_original>
// kernel: tpu_custom_call.1
$region0: #{tpu_custom_call.1}
  #allocation0 [shape = 'u32[]', space=smem, size = 0x4, offset = 0x4, fixed_abs, tag = 'smem constant byte address 0x4 - core index']
  #allocation1 [shape = 'u32[72,128]{1,0:T(1,128)}', space=vmem, size = 0x9000, scoped, tag = 'internal scratch']
  %s0 = inlined_call_operand.vmem [shape: f32[8,32], index: 0, kind: input, shape index: {}]
  %s1 = inlined_call_operand.vmem [shape: f32[16,32], index: 1, kind: input, shape index: {}]
  %s2 = inlined_call_operand.vmem [shape: f32[8,16], index: 2, kind: input, shape index: {}]
  %s3 = inlined_call_operand.vmem [shape: f32[32,32], index: 3, kind: input, shape index: {}]
  %s4 = inlined_call_operand.vmem [shape: f32[1,32], index: 4, kind: input, shape index: {}]
  %s5 = inlined_call_operand.vmem [shape: f32[32,32], index: 5, kind: input, shape index: {}]
  %s6 = inlined_call_operand.vmem [shape: f32[1,32], index: 6, kind: input, shape index: {}]
  %s7 = inlined_call_operand.vmem [shape: f32[64,32], index: 7, kind: input, shape index: {}]
  %s8 = inlined_call_operand.vmem [shape: f32[1,32], index: 8, kind: input, shape index: {}]
  %s9 = inlined_call_operand.hbm [shape: f32[16,16], index: 9, kind: output, shape index: {0}]
  %s10 = inlined_call_operand.hbm [shape: f32[8,32], index: 10, kind: output, shape index: {1}]
  %11 = xla_tuple %s9, %s10
  %s12 = sld [smem:[#allocation0]]
  $region54: #{tpu_custom_call.1} parent=0
    _
  %s14 = ssub.s32 1, %s12
  %s15 = scalar_select 0, %s14, %s12
  $region1: #{tpu_custom_call.1} parent=0
    #allocation2 [shape = 'u8[8192]{0}', space=vmem, size = 0x2000, scoped, tag = 'output window, operand 0, single buffered']
    #allocation3 [shape = 's32[1]{0}', space=sflag, size = 0x4, scoped, tag = 'scoped memory for tpu_custom_call.1']
    #allocation4 [shape = 'u8[4096]{0}', space=vmem, size = 0x1000, scoped, tag = 'output window, operand 1, single buffered']
    #allocation5 [shape = 's32[1]{0}', space=sflag, size = 0x4, scoped, tag = 'scoped memory for tpu_custom_call.1']
    %16 = vsyncpa [#allocation3], 0
    %17 = vsyncpa [#allocation5], 0
    // Predicated region
    $region2: #{tpu_custom_call.1} parent=1 // pred_check
      _
    $region3: #{tpu_custom_call.1} parent=1 // pred_check_branch
      %19 = sbr.rel (0) target = $region5
    $region4: #{tpu_custom_call.1} parent=1 // pred_region
      _
    $region5: #{tpu_custom_call.1} parent=1 // pred_fallthru
      _
    // Predicated region
    $region6: #{tpu_custom_call.1} parent=1 // pred_check
      _
    $region7: #{tpu_custom_call.1} parent=1 // pred_check_branch
      %21 = sbr.rel (0) target = $region9
    $region8: #{tpu_custom_call.1} parent=1 // pred_region
      _
    $region9: #{tpu_custom_call.1} parent=1 // pred_fallthru
      _
    // Predicated region
    $region10: #{tpu_custom_call.1} parent=1 // pred_check
      _
    $region11: #{tpu_custom_call.1} parent=1 // pred_check_branch
      %23 = sbr.rel (0) target = $region13
    $region12: #{tpu_custom_call.1} parent=1 // pred_region
      _
    $region13: #{tpu_custom_call.1} parent=1 // pred_fallthru
      _
    // Predicated region
    $region14: #{tpu_custom_call.1} parent=1 // pred_check
      _
    $region15: #{tpu_custom_call.1} parent=1 // pred_check_branch
      %25 = sbr.rel (0) target = $region17
    $region16: #{tpu_custom_call.1} parent=1 // pred_region
      _
    $region17: #{tpu_custom_call.1} parent=1 // pred_fallthru
      _
    // Predicated region
    $region18: #{tpu_custom_call.1} parent=1 // pred_check
      _
    $region19: #{tpu_custom_call.1} parent=1 // pred_check_branch
      %27 = sbr.rel (0) target = $region21
    $region20: #{tpu_custom_call.1} parent=1 // pred_region
      _
    $region21: #{tpu_custom_call.1} parent=1 // pred_fallthru
      _
    // Predicated region
    $region22: #{tpu_custom_call.1} parent=1 // pred_check
      _
    $region23: #{tpu_custom_call.1} parent=1 // pred_check_branch
      %29 = sbr.rel (0) target = $region25
    $region24: #{tpu_custom_call.1} parent=1 // pred_region
      _
    $region25: #{tpu_custom_call.1} parent=1 // pred_fallthru
      _
    // Predicated region
    $region26: #{tpu_custom_call.1} parent=1 // pred_check
      _
    $region27: #{tpu_custom_call.1} parent=1 // pred_check_branch
      %31 = sbr.rel (0) target = $region29
    $region28: #{tpu_custom_call.1} parent=1 // pred_region
      _
    $region29: #{tpu_custom_call.1} parent=1 // pred_fallthru
      _
    // Predicated region
    $region30: #{tpu_custom_call.1} parent=1 // pred_check
      _
    $region31: #{tpu_custom_call.1} parent=1 // pred_check_branch
      %33 = sbr.rel (0) target = $region33
    $region32: #{tpu_custom_call.1} parent=1 // pred_region
      _
    $region33: #{tpu_custom_call.1} parent=1 // pred_fallthru
      _
    // Predicated region
    $region34: #{tpu_custom_call.1} parent=1 // pred_check
      _
    $region35: #{tpu_custom_call.1} parent=1 // pred_check_branch
      %35 = sbr.rel (0) target = $region37
    $region36: #{tpu_custom_call.1} parent=1 // pred_region
      _
    $region37: #{tpu_custom_call.1} parent=1 // pred_fallthru
      _
    %v36 = vld [vmem:[%s0] sm:$0xff]
    %v37 = vld [vmem:[%s1] sm:$0xff]
    %v38 = vld [vmem:[%s1 + $0x8] sm:$0xff]
    %v39 = vld [vmem:[%s2] sm:$0xff]
    %v40 = vld [vmem:[%s3] sm:$0xff]
    %v41 = vld [vmem:[%s3 + $0x8] sm:$0xff]
    %v42 = vld [vmem:[%s3 + $0x10] sm:$0xff]
    %v43 = vld [vmem:[%s3 + $0x18] sm:$0xff]
    %v44 = vld [vmem:[%s4] sm:$0x1]
    %v46 = vperm.slane %v44, 0
    %vm48 = vcmask 261120
    %v50 = vsel %vm48, %v36, 0
    %52 = vmatpush.msra.mxu0 0.0
    %53 = vmatpush.msra.mxu0 0.0
    %54 = vmatpush.msra.mxu0 0.0
    %55 = vmatpush.msra.mxu0 0.0
    %56 = vmatpush.msra.mxu0 0.0
    %57 = vmatpush.msra.mxu0 0.0
    %58 = vmatpush.msra.mxu0 0.0
    %59 = vmatpush.msra.mxu0 0.0
    %60 = vmatpush.msra.mxu0 0.0
    %61 = vmatpush.msra.mxu0 0.0
    %62 = vmatpush.msra.mxu0 0.0
    %63 = vmatpush.msra.mxu0 0.0
    %64 = vmatpush.msra.mxu0 %v43
    %65 = vmatpush.msra.mxu0 %v42
    %66 = vmatpush.msra.mxu0 %v41
    %67 = vmatpush.msra.mxu0 %v40
    %68 = vmatmul.f32.gmra.mxu0 %v50
    %v69 = vpop.f32.mrf.mxu0
    %v70 = vadd.f32 %v46, %v69
    %71 = vdwg.mxu0
    %v72 = vld [vmem:[%s5] sm:$0xff]
    %v73 = vld [vmem:[%s5 + $0x8] sm:$0xff]
    %v74 = vld [vmem:[%s5 + $0x10] sm:$0xff]
    %v75 = vld [vmem:[%s5 + $0x18] sm:$0xff]
    %v76 = vld [vmem:[%s6] sm:$0x1]
    %v78 = vperm.slane %v76, 0
    %v81 = vsel %vm48, %v37, 0
    %v84 = vsel %vm48, %v38, 0
    %86 = vmatpush.msra.mxu0 0.0
    %87 = vmatpush.msra.mxu0 0.0
    %88 = vmatpush.msra.mxu0 0.0
    %89 = vmatpush.msra.mxu0 0.0
    %90 = vmatpush.msra.mxu0 0.0
    %91 = vmatpush.msra.mxu0 0.0
    %92 = vmatpush.msra.mxu0 0.0
    %93 = vmatpush.msra.mxu0 0.0
    %94 = vmatpush.msra.mxu0 0.0
    %95 = vmatpush.msra.mxu0 0.0
    %96 = vmatpush.msra.mxu0 0.0
    %97 = vmatpush.msra.mxu0 0.0
    %98 = vmatpush.msra.mxu0 %v75
    %99 = vmatpush.msra.mxu0 %v74
    %100 = vmatpush.msra.mxu0 %v73
    %101 = vmatpush.msra.mxu0 %v72
    %102 = vmatmul.f32.gmra.mxu0 %v81
    %v103 = vpop.f32.mrf.mxu0
    %v104 = vadd.f32 %v78, %v103
    %105 = vmatmul.f32.gmra.mxu0 %v84
    %v106 = vpop.f32.mrf.mxu0
    %v107 = vadd.f32 %v78, %v106
    %108 = vdwg.mxu0
    %vm109 = vcmask 130048
    %v111 = vsel %vm109, %v70, 0
    %v114 = vsel %vm109, %v104, 0
    %v117 = vsel %vm109, %v107, 0
    %119 = vmatpush.xpose.msra.mxu0 0.0
    %120 = vmatpush.xpose.msra.mxu0 0.0
    %121 = vmatpush.xpose.msra.mxu0 0.0
    %122 = vmatpush.xpose.msra.mxu0 0.0
    %123 = vmatpush.xpose.msra.mxu0 0.0
    %124 = vmatpush.xpose.msra.mxu0 0.0
    %125 = vmatpush.xpose.msra.mxu0 0.0
    %126 = vmatpush.xpose.msra.mxu0 0.0
    %127 = vmatpush.xpose.msra.mxu0 0.0
    %128 = vmatpush.xpose.msra.mxu0 0.0
    %129 = vmatpush.xpose.msra.mxu0 0.0
    %130 = vmatpush.xpose.msra.mxu0 0.0
    %131 = vmatpush.xpose.msra.mxu0 0.0
    %132 = vmatpush.xpose.msra.mxu0 0.0
    %133 = vmatpush.xpose.msra.mxu0 %v117
    %134 = vmatpush.xpose.msra.mxu0 %v114
    %135 = vmatmul.f32.gmra.mxu0 %v111
    %v136 = vpop.f32.mrf.mxu0
    %v137 = vadd.f32 0.0, %v136
    %138 = vdwg.mxu0
    %v139 = vmul.f32 %v137, %v39
    %v140 = vsel %vm109, %v139, -inf
    %141 = vmax.xlane.f32.xlu0 %v140
    %v142 = vpop.xlane.xlu0 %141
    %v143 = vsub.f32 %v139, %v142
    %v144 = vmul.f32 %v143, 1.442695
    %v145 = vpow.pop %v144
    %v146 = vsel %vm109, %v145, 0.0
    %147 = vadd.xlane.f32.xlu0 %v146
    %v148 = vpop.xlane.xlu0 %147
    %v149 = vrcp.pop %v148
    %v150 = vmul.f32 %v148, %v149
    %v151 = vsub.f32 1.0, %v150
    %v152 = vmul.f32 %v149, %v151
    %v153 = vadd.f32 %v149, %v152
    %vm154 = vweird.f32 %v148
    %vm155 = vweird.f32 %v149
    %vm156 = vmor %vm154, %vm155
    %v157 = vsel %vm156, %v149, %v153
    %v158 = vand.u32 2147483647, %v148
    %vm159 = vcmp.eq.f32.partialorder %v158, 8.507059e+37
    %v160 = vand.u32 %v148, 2147483648
    %v161 = vor.u32 1.1754944e-38, %v160
    %v162 = vsel %vm159, %v161, %v157
    %v163 = vmul.f32 %v145, %v162
    %v165 = vsel %vm109, %v163, 0
    %167 = vmatpush.msra.mxu0 0.0
    %168 = vmatpush.msra.mxu0 0.0
    %169 = vmatpush.msra.mxu0 0.0
    %170 = vmatpush.msra.mxu0 0.0
    %171 = vmatpush.msra.mxu0 0.0
    %172 = vmatpush.msra.mxu0 0.0
    %173 = vmatpush.msra.mxu0 0.0
    %174 = vmatpush.msra.mxu0 0.0
    %175 = vmatpush.msra.mxu0 0.0
    %176 = vmatpush.msra.mxu0 0.0
    %177 = vmatpush.msra.mxu0 0.0
    %178 = vmatpush.msra.mxu0 0.0
    %179 = vmatpush.msra.mxu0 0.0
    %180 = vmatpush.msra.mxu0 0.0
    %181 = vmatpush.msra.mxu0 %v38
    %182 = vmatpush.msra.mxu0 %v37
    %183 = vmatmul.f32.gmra.mxu0 %v165
    %v184 = vpop.f32.mrf.mxu0
    %v185 = vadd.f32 0.0, %v184
    %186 = vdwg.mxu0
    %187 = vrot.lane.b32.xlu0 %v70, 112
    %v188 = vpop.permute.xlu0 %187
    %189 = vrot.lane.b32.xlu0 %v104, 112
    %v190 = vpop.permute.xlu0 %189
    %191 = vrot.lane.b32.xlu0 %v107, 112
    %v192 = vpop.permute.xlu0 %191
    %v193 = vsel %vm109, %v188, 0
    %v195 = vsel %vm109, %v190, 0
    %v197 = vsel %vm109, %v192, 0
    %199 = vmatpush.xpose.msra.mxu0 0.0
    %200 = vmatpush.xpose.msra.mxu0 0.0
    %201 = vmatpush.xpose.msra.mxu0 0.0
    %202 = vmatpush.xpose.msra.mxu0 0.0
    %203 = vmatpush.xpose.msra.mxu0 0.0
    %204 = vmatpush.xpose.msra.mxu0 0.0
    %205 = vmatpush.xpose.msra.mxu0 0.0
    %206 = vmatpush.xpose.msra.mxu0 0.0
    %207 = vmatpush.xpose.msra.mxu0 0.0
    %208 = vmatpush.xpose.msra.mxu0 0.0
    %209 = vmatpush.xpose.msra.mxu0 0.0
    %210 = vmatpush.xpose.msra.mxu0 0.0
    %211 = vmatpush.xpose.msra.mxu0 0.0
    %212 = vmatpush.xpose.msra.mxu0 0.0
    %213 = vmatpush.xpose.msra.mxu0 %v197
    %214 = vmatpush.xpose.msra.mxu0 %v195
    %215 = vmatmul.f32.gmra.mxu0 %v193
    %v216 = vpop.f32.mrf.mxu0
    %v217 = vadd.f32 0.0, %v216
    %218 = vdwg.mxu0
    %v219 = vmul.f32 %v217, %v39
    %v220 = vsel %vm109, %v219, -inf
    %221 = vmax.xlane.f32.xlu0 %v220
    %v222 = vpop.xlane.xlu0 %221
    %v223 = vsub.f32 %v219, %v222
    %v224 = vmul.f32 %v223, 1.442695
    %v225 = vpow.pop %v224
    %v226 = vsel %vm109, %v225, 0.0
    %227 = vadd.xlane.f32.xlu0 %v226
    %v228 = vpop.xlane.xlu0 %227
    %v229 = vrcp.pop %v228
    %v230 = vmul.f32 %v228, %v229
    %v231 = vsub.f32 1.0, %v230
    %v232 = vmul.f32 %v229, %v231
    %v233 = vadd.f32 %v229, %v232
    %vm234 = vweird.f32 %v228
    %vm235 = vweird.f32 %v229
    %vm236 = vmor %vm234, %vm235
    %v237 = vsel %vm236, %v229, %v233
    %v238 = vand.u32 2147483647, %v228
    %vm239 = vcmp.eq.f32.partialorder %v238, 8.507059e+37
    %v240 = vand.u32 %v228, 2147483648
    %v241 = vor.u32 1.1754944e-38, %v240
    %v242 = vsel %vm239, %v241, %v237
    %v243 = vmul.f32 %v225, %v242
    %v245 = vsel %vm109, %v243, 0
    %247 = vmatpush.msra.mxu0 0.0
    %248 = vmatpush.msra.mxu0 0.0
    %249 = vmatpush.msra.mxu0 0.0
    %250 = vmatpush.msra.mxu0 0.0
    %251 = vmatpush.msra.mxu0 0.0
    %252 = vmatpush.msra.mxu0 0.0
    %253 = vmatpush.msra.mxu0 0.0
    %254 = vmatpush.msra.mxu0 0.0
    %255 = vmatpush.msra.mxu0 0.0
    %256 = vmatpush.msra.mxu0 0.0
    %257 = vmatpush.msra.mxu0 0.0
    %258 = vmatpush.msra.mxu0 0.0
    %259 = vmatpush.msra.mxu0 0.0
    %260 = vmatpush.msra.mxu0 0.0
    %261 = vmatpush.msra.mxu0 %v38
    %262 = vmatpush.msra.mxu0 %v37
    %263 = vmatmul.f32.gmra.mxu0 %v245
    %v264 = vpop.f32.mrf.mxu0
    %v265 = vadd.f32 0.0, %v264
    %266 = vdwg.mxu0
    %267 = vst.msk [vmem:[#allocation2] sm:$0xff] %vm109, %v163
    %268 = vst.msk [vmem:[#allocation2 + $0x8] sm:$0xff] %vm109, %v243
    %270 = vrot.lane.b32.xlu0 %v265, 32
    %v271 = vpop.permute.xlu0 %270
    %v273 = vsel %vm48, %v185, %v271
    %v274 = vld [vmem:[%s7] sm:$0xff]
    %v275 = vld [vmem:[%s7 + $0x8] sm:$0xff]
    %v276 = vld [vmem:[%s7 + $0x10] sm:$0xff]
    %v277 = vld [vmem:[%s7 + $0x18] sm:$0xff]
    %v278 = vld [vmem:[%s7 + $0x20] sm:$0xff]
    %v279 = vld [vmem:[%s7 + $0x28] sm:$0xff]
    %v280 = vld [vmem:[%s7 + $0x30] sm:$0xff]
    %v281 = vld [vmem:[%s7 + $0x38] sm:$0xff]
    %v282 = vld [vmem:[%s8] sm:$0x1]
    %v284 = vperm.slane %v282, 0
    %vm286 = vcmask 523264
    %v288 = vsel %vm286, %v273, 0
    %290 = vmatpush.msra.mxu0 0.0
    %291 = vmatpush.msra.mxu0 0.0
    %292 = vmatpush.msra.mxu0 0.0
    %293 = vmatpush.msra.mxu0 0.0
    %294 = vmatpush.msra.mxu0 0.0
    %295 = vmatpush.msra.mxu0 0.0
    %296 = vmatpush.msra.mxu0 0.0
    %297 = vmatpush.msra.mxu0 0.0
    %298 = vmatpush.msra.mxu0 %v281
    %299 = vmatpush.msra.mxu0 %v280
    %300 = vmatpush.msra.mxu0 %v279
    %301 = vmatpush.msra.mxu0 %v278
    %302 = vmatpush.msra.mxu0 %v277
    %303 = vmatpush.msra.mxu0 %v276
    %304 = vmatpush.msra.mxu0 %v275
    %305 = vmatpush.msra.mxu0 %v274
    %306 = vmatmul.f32.gmra.mxu0 %v288
    %v307 = vpop.f32.mrf.mxu0
    %v308 = vadd.f32 %v284, %v307
    %309 = vdwg.mxu0
    %310 = vst.msk [vmem:[#allocation4] sm:$0xff] %vm48, %v308
    // Predicated region
    $region38: #{tpu_custom_call.1} parent=1 // pred_check
      _
    $region39: #{tpu_custom_call.1} parent=1 // pred_check_branch
      %312 = sbr.rel (0) target = $region41
    $region40: #{tpu_custom_call.1} parent=1 // pred_region
      %314 = vsyncadd [#allocation3], 0
      %s315 = sshll.u32 [#allocation2], 4
      %s316 = int_to_ptr.vmem [resolvable:$true] %s315
      %s317 = sshll.u32 %s9, 4
      %s318 = int_to_ptr.hbm [resolvable:$true] %s317
      %323 = dma.vmem_to_hbm [thread:$0]  %s316, 256, %s318, [#allocation3], 128, 128, 8
    $region41: #{tpu_custom_call.1} parent=1 // pred_fallthru
      _
    // Predicated region
    $region42: #{tpu_custom_call.1} parent=1 // pred_check
      _
    $region43: #{tpu_custom_call.1} parent=1 // pred_check_branch
      %325 = sbr.rel (0) target = $region45
    $region44: #{tpu_custom_call.1} parent=1 // pred_region
      %327 = vsyncadd [#allocation5], 0
      %s329 = sshll.u32 [#allocation4], 4
      %s330 = int_to_ptr.vmem [resolvable:$true] %s329
      %s331 = sshll.u32 %s10, 4
      %s332 = int_to_ptr.hbm [resolvable:$true] %s331
      %334 = dma.vmem_to_hbm [thread:$0]  %s330, 128, %s332, [#allocation5]
    $region45: #{tpu_custom_call.1} parent=1 // pred_fallthru
      _
    // Predicated region
    $region46: #{tpu_custom_call.1} parent=1 // pred_check
      _
    $region47: #{tpu_custom_call.1} parent=1 // pred_check_branch
      %336 = sbr.rel (0) target = $region49
    $region48: #{tpu_custom_call.1} parent=1 // pred_region
      %338 = dma.done [#allocation3], 256
    $region49: #{tpu_custom_call.1} parent=1 // pred_fallthru
      _
    // Predicated region
    $region50: #{tpu_custom_call.1} parent=1 // pred_check
      _
    $region51: #{tpu_custom_call.1} parent=1 // pred_check_branch
      %340 = sbr.rel (0) target = $region53
    $region52: #{tpu_custom_call.1} parent=1 // pred_region
      %342 = dma.done [#allocation5], 128
    $region53: #{tpu_custom_call.1} parent=1 // pred_fallthru
      _
    %343 = vsyncpa [#allocation3], 1
    %344 = vsyncpa [#allocation5], 1

</llo_original>
